<compile_context>
chip_gen: v5e
topology: v5e:2x2
jax: 0.10.0
libtpu: 0.0.40
codegen_flags: <defaults>
</compile_context>

<pallas_src>
import math

import jax
import jax.numpy as jnp
from jax.experimental import pallas as pl
from jax.experimental.pallas import tpu as pltpu


def _gated_connector_kernel(alpha_ref, x_ref, o_ref):
    # alpha_ref: (1, C) resident gate params; x_ref / o_ref: (TM, C) row tile.
    # tanh in f32 on the EUP (free slot under the HBM-bound DMA window); the
    # broadcast multiply stays in the input dtype (bf16 VALU on v6e/v7x) to
    # keep elementwise VMEM temporaries small and tiles big.
    gate = jnp.tanh(alpha_ref[...].astype(jnp.float32)).astype(x_ref.dtype)
    o_ref[...] = (x_ref[...] * gate).astype(o_ref.dtype)


def _ceil_to(x: int, m: int) -> int:
    return ((x + m - 1) // m) * m


def _fold_factor(rows0: int, d: int, *, target_lanes: int = 512,
                 max_lanes: int = 1024) -> int:
    """Fold k consecutive D-rows into one lane-dense row of width k*D.

    Returns 1 when D is already a multiple of 128 (no fold, no alpha tiling
    needed), 0 when no clean fold exists (caller falls back to XLA rather than
    emitting lane-sparse masked stores)."""
    if d % 128 == 0:
        return 1
    k = 128 // math.gcd(d, 128)          # smallest k with (k*d) % 128 == 0
    if rows0 % k != 0 or k * d > max_lanes:
        return 0
    while k * d < target_lanes and rows0 % (2 * k) == 0 and 2 * k * d <= max_lanes:
        k *= 2
    return k


def _tpu_vmem_plan():
    """-> (tile budget bytes, vmem_limit_bytes, #TensorCores sharing the grid)."""
    vmem_cap = 64 * 1024 * 1024          # conservative default (v7x per-TC VMEM)
    try:
        info = pltpu.get_tpu_info()
        vmem_cap = int(getattr(info, "vmem_capacity_bytes", vmem_cap))
    except Exception:                    # non-TPU / older runtime: keep defaults
        pass
    # Heuristic: v7x exposes 64 MiB/TC and has 2 TCs/chip; v5e/v6e 128 MiB, 1 TC.
    num_tc = 2 if vmem_cap < 96 * 1024 * 1024 else 1
    # Budget covers 2x(in) + 2x(out) double buffers plus ~1 tile of elementwise
    # temporaries; leave generous headroom below the physical capacity.
    budget = min(40 * 1024 * 1024, vmem_cap // 2)
    vmem_limit = min(vmem_cap - 8 * 1024 * 1024, budget + 16 * 1024 * 1024)
    return budget, vmem_limit, num_tc


def _row_tile(rows: int, cols: int, itemsize: int, budget: int, num_tc: int) -> int:
    """Largest VMEM-budget-fitting row tile, dtype-sublane aligned; on 2-TC
    chips capped so the 'parallel' grid has >=2 (preferably even #) steps."""
    pack = 8 * max(1, 4 // itemsize)     # sublane packing: 8 f32 / 16 bf16 / 32 int8
    row_bytes = cols * itemsize
    tm = budget // (5 * row_bytes)       # 4 double-buffered IO tiles + ~1 temp tile
    tm = max(pack, (tm // pack) * pack)
    if num_tc > 1 and rows >= 2 * pack:
        tm = min(tm, _ceil_to((rows + 1) // 2, pack))   # >= 2 steps for 2 TCs
    tm = min(tm, rows)                   # full extent is always a legal block dim
    steps = pl.cdiv(rows, tm)
    if num_tc > 1 and steps > 2 and steps % 2 == 1:
        # best-effort: an even step count balances the two-core grid split
        cand = min(rows, max(pack, _ceil_to(pl.cdiv(rows, steps + 1), pack)))
        if pl.cdiv(rows, cand) % 2 == 0:
            tm = cand
    return tm


def gated_connector(inx: jax.Array, alpha: jax.Array, *,
                    donate_input: bool = False,
                    min_pallas_bytes: int = 256 * 1024,
                    tile_budget_bytes=None) -> jax.Array:
    """out = tanh(alpha) * inx, with alpha (D,) broadcast over the last axis."""
    orig_shape = inx.shape
    D = orig_shape[-1]
    assert alpha.shape == (D,), f"alpha must be ({D},), got {alpha.shape}"

    rows0 = 1
    for s in orig_shape[:-1]:
        rows0 *= s
    nbytes = rows0 * D * inx.dtype.itemsize

    k = _fold_factor(rows0, D)
    if nbytes < min_pallas_bytes or k == 0:
        # Tiny inputs: pallas launch overhead dominates. k == 0: rows can't be
        # folded to a 128-lane-multiple width, so a pallas path would hit the
        # masked-partial-store cliff; XLA's fused elementwise op is better.
        gate = jnp.tanh(alpha.astype(jnp.float32))
        return (gate * inx.astype(jnp.float32)).astype(inx.dtype)

    rows, cols = rows0 // k, k * D
    x2d = inx.reshape(rows, cols)                        # free row-major reshape
    if k == 1:
        alpha_row = alpha.reshape(1, cols)               # no wrapper-side tile op
    else:
        alpha_row = jnp.tile(alpha, k).reshape(1, cols)  # gate repeats per folded row

    budget, vmem_limit, num_tc = _tpu_vmem_plan()
    if tile_budget_bytes is not None:
        budget = int(tile_budget_bytes)
    tm = _row_tile(rows, cols, x2d.dtype.itemsize, budget, num_tc)
    steps = pl.cdiv(rows, tm)

    out2d = pl.pallas_call(
        _gated_connector_kernel,
        out_shape=jax.ShapeDtypeStruct((rows, cols), inx.dtype),
        grid_spec=pltpu.PrefetchScalarGridSpec(
            num_scalar_prefetch=0,
            grid=(steps,),
            in_specs=[
                # alpha: constant block index -> stays resident, no per-step DMA
                pl.BlockSpec((1, cols), lambda i: (0, 0)),
                # x: one (tm, cols) row tile per grid step
                pl.BlockSpec((tm, cols), lambda i: (i, 0)),
            ],
            out_specs=pl.BlockSpec((tm, cols), lambda i: (i, 0)),
        ),
        compiler_params=pltpu.CompilerParams(
            dimension_semantics=("parallel",),   # megacore-shardable on v7x
            vmem_limit_bytes=vmem_limit,
        ),
        cost_estimate=pl.CostEstimate(
            flops=rows * cols,
            transcendentals=cols * steps,
            bytes_accessed=2 * rows * cols * inx.dtype.itemsize
            + cols * alpha_row.dtype.itemsize,
        ),
        # When the caller donates inx, write the result in place (same HBM
        # traffic, but no second full-size output allocation).
        input_output_aliases=({1: 0} if donate_input else {}),
    )(alpha_row, x2d)

    return out2d.reshape(orig_shape)


if __name__ == "__main__":
    key = jax.random.PRNGKey(0)
    k1, k2, k3, k4 = jax.random.split(key, 4)

    def ref(x, a):
        return (jnp.tanh(a.astype(jnp.float32)) * x.astype(jnp.float32)).astype(x.dtype)

    # 1) Tiny module-typical (B, S, D) case — routed through the XLA fast path.
    B, S, D = 2, 8, 32
    x_tiny = jax.random.normal(k1, (B, S, D), dtype=jnp.float32)
    a_zero = jnp.zeros((D,), jnp.float32)            # module init: zeros(dim)
    a_tiny = jax.random.normal(k2, (D,), dtype=jnp.float32)
    out0 = jax.block_until_ready(gated_connector(x_tiny, a_zero))
    out1 = jax.block_until_ready(gated_connector(x_tiny, a_tiny))
    assert out0.shape == x_tiny.shape and out0.dtype == x_tiny.dtype
    assert jnp.allclose(out0, ref(x_tiny, a_zero), atol=1e-6)
    assert jnp.allclose(out1, ref(x_tiny, a_tiny), atol=1e-6)

    # 2) Pallas path, D multiple of 128 (no fold); default tiling, then a
    #    forced-small tile budget to exercise the multi-step pipelined grid
    #    with a partial last row block.
    B2, S2, D2 = 4, 500, 256
    x2 = jax.random.normal(k3, (B2, S2, D2), dtype=jnp.float32)
    a2 = jax.random.normal(k4, (D2,), dtype=jnp.float32)
    out2 = jax.block_until_ready(gated_connector(x2, a2))
    assert jnp.allclose(out2, ref(x2, a2), atol=1e-5)
    out2b = jax.block_until_ready(gated_connector(x2, a2, tile_budget_bytes=128 * 1024))
    assert jnp.allclose(out2b, ref(x2, a2), atol=1e-5)

    # 3) Pallas path with lane folding (D = 96 is not a multiple of 128).
    x3 = jax.random.normal(k1, (4, 1024, 96), dtype=jnp.float32)
    a3 = jax.random.normal(k2, (96,), dtype=jnp.float32)
    out3 = jax.block_until_ready(gated_connector(x3, a3))
    assert jnp.allclose(out3, ref(x3, a3), atol=1e-5)

    # 4) bf16 streaming path (multiply stays in bf16 on the VPU).
    x4 = x2.astype(jnp.bfloat16)
    out4 = jax.block_until_ready(gated_connector(x4, a2))
    assert out4.dtype == jnp.bfloat16
    assert jnp.allclose(out4.astype(jnp.float32), ref(x2, a2), atol=5e-2, rtol=5e-2)

    print("KERNEL_OK")
</pallas_src>

<mosaic_0001>
module attributes {stable_mosaic.version = 11 : i64} {
  func.func @_gated_connector_kernel(%arg0: i32, %arg1: memref<1x256xf32, #tpu.memory_space<vmem>>, %arg2: memref<1000x256xf32, #tpu.memory_space<vmem>>, %arg3: memref<1000x256xf32, #tpu.memory_space<vmem>>) attributes {dimension_semantics = [#tpu.dimension_semantics<parallel>], iteration_bounds = array<i64: 2>, scalar_prefetch = 0 : i64, scratch_operands = 0 : i64, tpu.core_type = #tpu.core_type<tc>, window_params = [{pipeline_mode = #tpu.pipeline_mode<synchronous>, transform_indices = @transform_0, window_bounds = array<i64: 1, 256>}, {transform_indices = @transform_1, window_bounds = array<i64: 1000, 256>}, {transform_indices = @transform_2, window_bounds = array<i64: 1000, 256>}]} {
    %c0 = arith.constant 0 : index
    %c0_0 = arith.constant 0 : index
    %0 = vector.load %arg1[%c0, %c0_0] : memref<1x256xf32, #tpu.memory_space<vmem>>, vector<1x256xf32>
    %1 = math.tanh %0 : vector<1x256xf32>
    %c0_1 = arith.constant 0 : index
    %c0_2 = arith.constant 0 : index
    %2 = vector.load %arg2[%c0_1, %c0_2] : memref<1000x256xf32, #tpu.memory_space<vmem>>, vector<1000x256xf32>
    %3 = vector.broadcast %1 : vector<1x256xf32> to vector<1000x256xf32>
    %4 = arith.mulf %2, %3 : vector<1000x256xf32>
    %c0_3 = arith.constant 0 : index
    %c0_4 = arith.constant 0 : index
    %5 = vector.load %arg3[%c0_3, %c0_4] : memref<1000x256xf32, #tpu.memory_space<vmem>>, vector<1000x256xf32>
    tpu.vector_store %arg3[%c0_3, %c0_4], %4 {strides = array<i32>} : memref<1000x256xf32, #tpu.memory_space<vmem>>, vector<1000x256xf32>,
    return
  }
  func.func @transform_0(%arg0: i32) -> (i32, i32) {
    %c0_i32 = arith.constant 0 : i32
    %c0_i32_0 = arith.constant 0 : i32
    %c0_i32_1 = arith.constant 0 : i32
    return %c0_i32, %c0_i32_0 : i32, i32
  }
  func.func @transform_1(%arg0: i32) -> (i32, i32) {
    %c0_i32 = arith.constant 0 : i32
    %c0_i32_0 = arith.constant 0 : i32
    return %arg0, %c0_i32 : i32, i32
  }
  func.func @transform_2(%arg0: i32) -> (i32, i32) {
    %c0_i32 = arith.constant 0 : i32
    %c0_i32_0 = arith.constant 0 : i32
    return %arg0, %c0_i32 : i32, i32
  }
}

</mosaic_0001>

<llo_original>
// kernel: tpu_custom_call.1
$region0: #{tpu_custom_call.1}
  #allocation0 [shape = 'u32[]', space=smem, size = 0x4, offset = 0x4, fixed_abs, tag = 'smem constant byte address 0x4 - core index']
  #allocation1 [shape = 'u32[72,128]{1,0:T(1,128)}', space=vmem, size = 0x9000, scoped, tag = 'internal scratch']
  %s0 = inlined_call_operand.hbm [shape: f32[1,256], index: 0, kind: input, shape index: {}]
  %s1 = inlined_call_operand.hbm [shape: f32[2000,256], index: 1, kind: input, shape index: {}]
  %s2 = inlined_call_operand.hbm [shape: f32[2000,256], index: 2, kind: output, shape index: {}]
  %s3 = sld [smem:[#allocation0]]
  $region49: #{tpu_custom_call.1} parent=0
    _
  %s5 = ssub.s32 1, %s3
  %s6 = scalar_select 0, %s5, %s3
  $region1: #{tpu_custom_call.1} parent=0
    #allocation2 [shape = 'u8[1024]{0}', space=vmem, size = 0x400, scoped, tag = 'input window, operand 0, single buffered']
    #allocation3 [shape = 's32[2]{0}', space=sflag, size = 0x8, scoped, tag = 'scoped memory for tpu_custom_call.1']
    #allocation4 [shape = 's32[2]{0}', space=sflag, size = 0x8, scoped, tag = 'scoped memory for tpu_custom_call.1']
    #allocation5 [shape = 'u8[2048000]{0}', space=vmem, size = 0x1f4000, scoped, tag = 'input window, operand 1']
    #allocation6 [shape = 's32[2]{0}', space=sflag, size = 0x8, scoped, tag = 'scoped memory for tpu_custom_call.1']
    #allocation7 [shape = 'u8[2048000]{0}', space=vmem, size = 0x1f4000, scoped, tag = 'output window, operand 0']
    %7 = vsyncpa [#allocation3], 0
    %8 = vsyncpa [#allocation6], 0
    %s9 = scalar_lea.sflag [#allocation6], 1
    %10 = vsyncpa %s9, 0
    %11 = vsyncpa [#allocation4], 0
    %s12 = scalar_lea.sflag [#allocation4], 1
    %13 = vsyncpa %s12, 0
    loop: start=0, step=1, limit=4
    $region2: #{tpu_custom_call.1} parent=1 // loop_pre_header
      _
    $region3: #{tpu_custom_call.1} parent=1 // loop_header
      %s15 = sphi 0, %s19
      %p16 = scmp.ge.s32.totalorder %s15, 4
      %s23 = sphi 0, %s23
      %s25 = sphi 0, %s23
      %s26 = sphi 0, %s25
      %s40 = sphi 0, %s26
      %s46 = sphi 0, %s48
      %s49 = sphi 0, %s46
      %s50 = sphi 0, %s49
      %s66 = sphi 0, %s50
      %s72 = sphi 0, %s74
      %s75 = sphi 0, %s72
      %s76 = sphi 0, %s75
      %s92 = sphi 0, %s76
    $region4: #{tpu_custom_call.1} parent=1 // loop_header_branch
      %18 = sbr.rel (%p16) target = $region8
    $region5: #{tpu_custom_call.1} parent=1 // loop_body
      %s20 = ssub.s32 %s15, 1
      %s21 = ssub.s32 %s15, 2
      %s22 = sadd.s32 %s15, 1
      %s24 = sadd.s32 %s23, 1
      %p27 = scmp.eq.s32.totalorder %s15, 1
      %p28 = scmp.ne.s32.totalorder %s23, %s25
      %p29 = scmp.eq.s32.totalorder %s15, 0
      %p30 = por %p28, %p29
      %p31 = scmp.ne.s32.totalorder %s23, %s25
      %p32 = scmp.eq.s32.totalorder %s20, 1
      %p33 = por %p31, %p32
      %p34 = scmp.ne.s32.totalorder %s25, %s26
      %p35 = scmp.eq.s32.totalorder %s20, 0
      %p36 = por %p34, %p35
      %p37 = scmp.ne.s32.totalorder %s25, %s26
      %p38 = scmp.eq.s32.totalorder %s21, 1
      %p39 = por %p37, %p38
      %p41 = scmp.ne.s32.totalorder %s26, %s40
      %p42 = scmp.eq.s32.totalorder %s21, 0
      %p43 = por %p41, %p42
      %s44 = ssub.s32 %s15, %s22
      %p45 = scmp.eq.s32.totalorder %s44, 0
      %s47 = sadd.s32 %s46, 1
      %s48 = scalar_select %p45, %s46, %s47
      %p51 = pneg %p45
      %p52 = scmp.eq.s32.totalorder %s15, 1
      %p53 = por %p51, %p52
      %p54 = scmp.ne.s32.totalorder %s46, %s49
      %p55 = scmp.eq.s32.totalorder %s15, 0
      %p56 = por %p54, %p55
      %p57 = scmp.ne.s32.totalorder %s46, %s49
      %p58 = scmp.eq.s32.totalorder %s20, 1
      %p59 = por %p57, %p58
      %p60 = scmp.ne.s32.totalorder %s49, %s50
      %p61 = scmp.eq.s32.totalorder %s20, 0
      %p62 = por %p60, %p61
      %p63 = scmp.ne.s32.totalorder %s49, %s50
      %p64 = scmp.eq.s32.totalorder %s21, 1
      %p65 = por %p63, %p64
      %p67 = scmp.ne.s32.totalorder %s50, %s66
      %p68 = scmp.eq.s32.totalorder %s21, 0
      %p69 = por %p67, %p68
      %s70 = ssub.s32 %s15, %s22
      %p71 = scmp.eq.s32.totalorder %s70, 0
      %s73 = sadd.s32 %s72, 1
      %s74 = scalar_select %p71, %s72, %s73
      %p77 = pneg %p71
      %p78 = scmp.eq.s32.totalorder %s15, 1
      %p79 = por %p77, %p78
      %p80 = scmp.ne.s32.totalorder %s72, %s75
      %p81 = scmp.eq.s32.totalorder %s15, 0
      %p82 = por %p80, %p81
      %p83 = scmp.ne.s32.totalorder %s72, %s75
      %p84 = scmp.eq.s32.totalorder %s20, 1
      %p85 = por %p83, %p84
      %p86 = scmp.ne.s32.totalorder %s75, %s76
      %p87 = scmp.eq.s32.totalorder %s20, 0
      %p88 = por %p86, %p87
      %p89 = scmp.ne.s32.totalorder %s75, %s76
      %p90 = scmp.eq.s32.totalorder %s21, 1
      %p91 = por %p89, %p90
      %p93 = scmp.ne.s32.totalorder %s76, %s92
      %p94 = scmp.eq.s32.totalorder %s21, 0
      %p95 = por %p93, %p94
      %p96 = scmp.le.s32.totalorder 1, %s15
      %p97 = scmp.lt.s32.totalorder %s15, 3
      %p98 = pnand %p96, %p97
      %p99 = pneg %p98
      // Predicated region
      $region9: #{tpu_custom_call.1} parent=5 // pred_check
        _
      $region10: #{tpu_custom_call.1} parent=5 // pred_check_branch
        %101 = sbr.rel (%p98) target = $region12
      $region11: #{tpu_custom_call.1} parent=5 // pred_region
        %s102 = ssub.s32 %s15, 1
        // Predicated region
        $region13: #{tpu_custom_call.1} parent=11 // pred_check
          %p103 = pneg %p36
        $region14: #{tpu_custom_call.1} parent=11 // pred_check_branch
          %105 = sbr.rel (%p103) target = $region16
        $region15: #{tpu_custom_call.1} parent=11 // pred_region
          %107 = vsyncadd [#allocation3], 0
          %s109 = sshll.u32 %s0, 4
          %s110 = int_to_ptr.hbm [resolvable:$true] %s109
          %s111 = sshll.u32 [#allocation2], 4
          %s112 = int_to_ptr.vmem [resolvable:$true] %s111
          %114 = dma.hbm_to_vmem [thread:$0]  %s110, 32, %s112, [#allocation3]
        $region16: #{tpu_custom_call.1} parent=11 // pred_fallthru
          _
      $region12: #{tpu_custom_call.1} parent=5 // pred_fallthru
        _
      %p115 = scmp.lt.s32.totalorder %s15, 2
      // Predicated region
      $region17: #{tpu_custom_call.1} parent=5 // pred_check
        %p116 = pneg %p115
      $region18: #{tpu_custom_call.1} parent=5 // pred_check_branch
        %118 = sbr.rel (%p116) target = $region20
      $region19: #{tpu_custom_call.1} parent=5 // pred_region
        // Predicated region
        $region21: #{tpu_custom_call.1} parent=19 // pred_check
          %p119 = pneg %p56
        $region22: #{tpu_custom_call.1} parent=19 // pred_check_branch
          %121 = sbr.rel (%p119) target = $region24
        $region23: #{tpu_custom_call.1} parent=19 // pred_region
          %s122 = sand.u32 %s46, 1
          %s123 = scalar_lea.sflag [#allocation6], %s122
          %s124 = sand.u32 %s46, 1
          %s125 = smul.addr %s124, 2000
          %s126 = scalar_lea.vmem [#allocation5], %s125
          %s127 = smul.u32 125, %s15
          %129 = vsyncadd %s123, 0
          %s130 = smul.addr %s127, 2
          %s131 = smul.addr %s130, 8
          %s132 = scalar_lea.hbm %s1, %s131
          %s133 = sshll.u32 %s132, 4
          %s134 = int_to_ptr.hbm [resolvable:$true] %s133
          %s135 = sshll.u32 %s126, 4
          %s136 = int_to_ptr.vmem [resolvable:$true] %s135
          %141 = dma.hbm_to_vmem [thread:$0]  %s134, 32000, %s136, %s123, 256, 256, 16
        $region24: #{tpu_custom_call.1} parent=19 // pred_fallthru
          _
      $region20: #{tpu_custom_call.1} parent=5 // pred_fallthru
        _
      %p142 = scmp.le.s32.totalorder 1, %s15
      %p143 = scmp.lt.s32.totalorder %s15, 3
      %p144 = pnand %p142, %p143
      %p145 = pneg %p144
      // Predicated region
      $region25: #{tpu_custom_call.1} parent=5 // pred_check
        _
      $region26: #{tpu_custom_call.1} parent=5 // pred_check_branch
        %147 = sbr.rel (%p144) target = $region28
      $region27: #{tpu_custom_call.1} parent=5 // pred_region
        %s148 = ssub.s32 %s15, 1
        // Predicated region
        $region29: #{tpu_custom_call.1} parent=27 // pred_check
          %p149 = pneg %p36
        $region30: #{tpu_custom_call.1} parent=27 // pred_check_branch
          %151 = sbr.rel (%p149) target = $region32
        $region31: #{tpu_custom_call.1} parent=27 // pred_region
          %153 = dma.done [#allocation3], 32
        $region32: #{tpu_custom_call.1} parent=27 // pred_fallthru
          _
        %s154 = sand.u32 %s49, 1
        %s155 = scalar_lea.sflag [#allocation6], %s154
        %s156 = sand.u32 %s49, 1
        %s157 = smul.addr %s156, 2000
        %s158 = scalar_lea.vmem [#allocation5], %s157
        // Predicated region
        $region33: #{tpu_custom_call.1} parent=27 // pred_check
          %p159 = pneg %p62
        $region34: #{tpu_custom_call.1} parent=27 // pred_check_branch
          %161 = sbr.rel (%p159) target = $region36
        $region35: #{tpu_custom_call.1} parent=27 // pred_region
          %163 = dma.done %s155, 32000
        $region36: #{tpu_custom_call.1} parent=27 // pred_fallthru
          _
        %p164 = pneg %p36
        %p165 = pneg %p33
        %s166 = sand.u32 %s49, 1
        %s167 = scalar_lea.sflag [#allocation6], %s166
        %s168 = sand.u32 %s49, 1
        %s169 = smul.addr %s168, 2000
        %s170 = scalar_lea.vmem [#allocation5], %s169
        %p171 = pneg %p62
        %p172 = pneg %p59
        %p173 = pneg %p88
        %p174 = pneg %p85
        %s175 = sand.u32 %s75, 1
        %s176 = scalar_lea.sflag [#allocation4], %s175
        %s177 = sand.u32 %s75, 1
        %s178 = smul.addr %s177, 2000
        %s179 = scalar_lea.vmem [#allocation7], %s178
        %s180 = smul.u32 125, %s20
        %s181 = smul.u32 125, %s20
        %v182 = vld [vmem:[#allocation2] sm:$0x3]
        %v183 = vtanh.pop %v182
        %v184 = vld [vmem:[%s158] sm:$0xff]
        %v185 = vld [vmem:[%s158 + $0x8] sm:$0xff]
        %v186 = vld [vmem:[%s158 + $0x10] sm:$0xff]
        %v187 = vld [vmem:[%s158 + $0x18] sm:$0xff]
        %v188 = vld [vmem:[%s158 + $0x20] sm:$0xff]
        %v189 = vld [vmem:[%s158 + $0x28] sm:$0xff]
        %v190 = vld [vmem:[%s158 + $0x30] sm:$0xff]
        %v191 = vld [vmem:[%s158 + $0x38] sm:$0xff]
        %v192 = vld [vmem:[%s158 + $0x40] sm:$0xff]
        %v193 = vld [vmem:[%s158 + $0x48] sm:$0xff]
        %v194 = vld [vmem:[%s158 + $0x50] sm:$0xff]
        %v195 = vld [vmem:[%s158 + $0x58] sm:$0xff]
        %v196 = vld [vmem:[%s158 + $0x60] sm:$0xff]
        %v197 = vld [vmem:[%s158 + $0x68] sm:$0xff]
        %v198 = vld [vmem:[%s158 + $0x70] sm:$0xff]
        %v199 = vld [vmem:[%s158 + $0x78] sm:$0xff]
        %v200 = vld [vmem:[%s158 + $0x80] sm:$0xff]
        %v201 = vld [vmem:[%s158 + $0x88] sm:$0xff]
        %v202 = vld [vmem:[%s158 + $0x90] sm:$0xff]
        %v203 = vld [vmem:[%s158 + $0x98] sm:$0xff]
        %v204 = vld [vmem:[%s158 + $0xa0] sm:$0xff]
        %v205 = vld [vmem:[%s158 + $0xa8] sm:$0xff]
        %v206 = vld [vmem:[%s158 + $0xb0] sm:$0xff]
        %v207 = vld [vmem:[%s158 + $0xb8] sm:$0xff]
        %v208 = vld [vmem:[%s158 + $0xc0] sm:$0xff]
        %v209 = vld [vmem:[%s158 + $0xc8] sm:$0xff]
        %v210 = vld [vmem:[%s158 + $0xd0] sm:$0xff]
        %v211 = vld [vmem:[%s158 + $0xd8] sm:$0xff]
        %v212 = vld [vmem:[%s158 + $0xe0] sm:$0xff]
        %v213 = vld [vmem:[%s158 + $0xe8] sm:$0xff]
        %v214 = vld [vmem:[%s158 + $0xf0] sm:$0xff]
        %v215 = vld [vmem:[%s158 + $0xf8] sm:$0xff]
        %v216 = vld [vmem:[%s158 + $0x100] sm:$0xff]
        %v217 = vld [vmem:[%s158 + $0x108] sm:$0xff]
        %v218 = vld [vmem:[%s158 + $0x110] sm:$0xff]
        %v219 = vld [vmem:[%s158 + $0x118] sm:$0xff]
        %v220 = vld [vmem:[%s158 + $0x120] sm:$0xff]
        %v221 = vld [vmem:[%s158 + $0x128] sm:$0xff]
        %v222 = vld [vmem:[%s158 + $0x130] sm:$0xff]
        %v223 = vld [vmem:[%s158 + $0x138] sm:$0xff]
        %v224 = vld [vmem:[%s158 + $0x140] sm:$0xff]
        %v225 = vld [vmem:[%s158 + $0x148] sm:$0xff]
        %v226 = vld [vmem:[%s158 + $0x150] sm:$0xff]
        %v227 = vld [vmem:[%s158 + $0x158] sm:$0xff]
        %v228 = vld [vmem:[%s158 + $0x160] sm:$0xff]
        %v229 = vld [vmem:[%s158 + $0x168] sm:$0xff]
        %v230 = vld [vmem:[%s158 + $0x170] sm:$0xff]
        %v231 = vld [vmem:[%s158 + $0x178] sm:$0xff]
        %v232 = vld [vmem:[%s158 + $0x180] sm:$0xff]
        %v233 = vld [vmem:[%s158 + $0x188] sm:$0xff]
        %v234 = vld [vmem:[%s158 + $0x190] sm:$0xff]
        %v235 = vld [vmem:[%s158 + $0x198] sm:$0xff]
        %v236 = vld [vmem:[%s158 + $0x1a0] sm:$0xff]
        %v237 = vld [vmem:[%s158 + $0x1a8] sm:$0xff]
        %v238 = vld [vmem:[%s158 + $0x1b0] sm:$0xff]
        %v239 = vld [vmem:[%s158 + $0x1b8] sm:$0xff]
        %v240 = vld [vmem:[%s158 + $0x1c0] sm:$0xff]
        %v241 = vld [vmem:[%s158 + $0x1c8] sm:$0xff]
        %v242 = vld [vmem:[%s158 + $0x1d0] sm:$0xff]
        %v243 = vld [vmem:[%s158 + $0x1d8] sm:$0xff]
        %v244 = vld [vmem:[%s158 + $0x1e0] sm:$0xff]
        %v245 = vld [vmem:[%s158 + $0x1e8] sm:$0xff]
        %v246 = vld [vmem:[%s158 + $0x1f0] sm:$0xff]
        %v247 = vld [vmem:[%s158 + $0x1f8] sm:$0xff]
        %v248 = vld [vmem:[%s158 + $0x200] sm:$0xff]
        %v249 = vld [vmem:[%s158 + $0x208] sm:$0xff]
        %v250 = vld [vmem:[%s158 + $0x210] sm:$0xff]
        %v251 = vld [vmem:[%s158 + $0x218] sm:$0xff]
        %v252 = vld [vmem:[%s158 + $0x220] sm:$0xff]
        %v253 = vld [vmem:[%s158 + $0x228] sm:$0xff]
        %v254 = vld [vmem:[%s158 + $0x230] sm:$0xff]
        %v255 = vld [vmem:[%s158 + $0x238] sm:$0xff]
        %v256 = vld [vmem:[%s158 + $0x240] sm:$0xff]
        %v257 = vld [vmem:[%s158 + $0x248] sm:$0xff]
        %v258 = vld [vmem:[%s158 + $0x250] sm:$0xff]
        %v259 = vld [vmem:[%s158 + $0x258] sm:$0xff]
        %v260 = vld [vmem:[%s158 + $0x260] sm:$0xff]
        %v261 = vld [vmem:[%s158 + $0x268] sm:$0xff]
        %v262 = vld [vmem:[%s158 + $0x270] sm:$0xff]
        %v263 = vld [vmem:[%s158 + $0x278] sm:$0xff]
        %v264 = vld [vmem:[%s158 + $0x280] sm:$0xff]
        %v265 = vld [vmem:[%s158 + $0x288] sm:$0xff]
        %v266 = vld [vmem:[%s158 + $0x290] sm:$0xff]
        %v267 = vld [vmem:[%s158 + $0x298] sm:$0xff]
        %v268 = vld [vmem:[%s158 + $0x2a0] sm:$0xff]
        %v269 = vld [vmem:[%s158 + $0x2a8] sm:$0xff]
        %v270 = vld [vmem:[%s158 + $0x2b0] sm:$0xff]
        %v271 = vld [vmem:[%s158 + $0x2b8] sm:$0xff]
        %v272 = vld [vmem:[%s158 + $0x2c0] sm:$0xff]
        %v273 = vld [vmem:[%s158 + $0x2c8] sm:$0xff]
        %v274 = vld [vmem:[%s158 + $0x2d0] sm:$0xff]
        %v275 = vld [vmem:[%s158 + $0x2d8] sm:$0xff]
        %v276 = vld [vmem:[%s158 + $0x2e0] sm:$0xff]
        %v277 = vld [vmem:[%s158 + $0x2e8] sm:$0xff]
        %v278 = vld [vmem:[%s158 + $0x2f0] sm:$0xff]
        %v279 = vld [vmem:[%s158 + $0x2f8] sm:$0xff]
        %v280 = vld [vmem:[%s158 + $0x300] sm:$0xff]
        %v281 = vld [vmem:[%s158 + $0x308] sm:$0xff]
        %v282 = vld [vmem:[%s158 + $0x310] sm:$0xff]
        %v283 = vld [vmem:[%s158 + $0x318] sm:$0xff]
        %v284 = vld [vmem:[%s158 + $0x320] sm:$0xff]
        %v285 = vld [vmem:[%s158 + $0x328] sm:$0xff]
        %v286 = vld [vmem:[%s158 + $0x330] sm:$0xff]
        %v287 = vld [vmem:[%s158 + $0x338] sm:$0xff]
        %v288 = vld [vmem:[%s158 + $0x340] sm:$0xff]
        %v289 = vld [vmem:[%s158 + $0x348] sm:$0xff]
        %v290 = vld [vmem:[%s158 + $0x350] sm:$0xff]
        %v291 = vld [vmem:[%s158 + $0x358] sm:$0xff]
        %v292 = vld [vmem:[%s158 + $0x360] sm:$0xff]
        %v293 = vld [vmem:[%s158 + $0x368] sm:$0xff]
        %v294 = vld [vmem:[%s158 + $0x370] sm:$0xff]
        %v295 = vld [vmem:[%s158 + $0x378] sm:$0xff]
        %v296 = vld [vmem:[%s158 + $0x380] sm:$0xff]
        %v297 = vld [vmem:[%s158 + $0x388] sm:$0xff]
        %v298 = vld [vmem:[%s158 + $0x390] sm:$0xff]
        %v299 = vld [vmem:[%s158 + $0x398] sm:$0xff]
        %v300 = vld [vmem:[%s158 + $0x3a0] sm:$0xff]
        %v301 = vld [vmem:[%s158 + $0x3a8] sm:$0xff]
        %v302 = vld [vmem:[%s158 + $0x3b0] sm:$0xff]
        %v303 = vld [vmem:[%s158 + $0x3b8] sm:$0xff]
        %v304 = vld [vmem:[%s158 + $0x3c0] sm:$0xff]
        %v305 = vld [vmem:[%s158 + $0x3c8] sm:$0xff]
        %v306 = vld [vmem:[%s158 + $0x3d0] sm:$0xff]
        %v307 = vld [vmem:[%s158 + $0x3d8] sm:$0xff]
        %v308 = vld [vmem:[%s158 + $0x3e0] sm:$0xff]
        %v309 = vld [vmem:[%s158 + $0x3e8] sm:$0xff]
        %v310 = vld [vmem:[%s158 + $0x3f0] sm:$0xff]
        %v311 = vld [vmem:[%s158 + $0x3f8] sm:$0xff]
        %v312 = vld [vmem:[%s158 + $0x400] sm:$0xff]
        %v313 = vld [vmem:[%s158 + $0x408] sm:$0xff]
        %v314 = vld [vmem:[%s158 + $0x410] sm:$0xff]
        %v315 = vld [vmem:[%s158 + $0x418] sm:$0xff]
        %v316 = vld [vmem:[%s158 + $0x420] sm:$0xff]
        %v317 = vld [vmem:[%s158 + $0x428] sm:$0xff]
        %v318 = vld [vmem:[%s158 + $0x430] sm:$0xff]
        %v319 = vld [vmem:[%s158 + $0x438] sm:$0xff]
        %v320 = vld [vmem:[%s158 + $0x440] sm:$0xff]
        %v321 = vld [vmem:[%s158 + $0x448] sm:$0xff]
        %v322 = vld [vmem:[%s158 + $0x450] sm:$0xff]
        %v323 = vld [vmem:[%s158 + $0x458] sm:$0xff]
        %v324 = vld [vmem:[%s158 + $0x460] sm:$0xff]
        %v325 = vld [vmem:[%s158 + $0x468] sm:$0xff]
        %v326 = vld [vmem:[%s158 + $0x470] sm:$0xff]
        %v327 = vld [vmem:[%s158 + $0x478] sm:$0xff]
        %v328 = vld [vmem:[%s158 + $0x480] sm:$0xff]
        %v329 = vld [vmem:[%s158 + $0x488] sm:$0xff]
        %v330 = vld [vmem:[%s158 + $0x490] sm:$0xff]
        %v331 = vld [vmem:[%s158 + $0x498] sm:$0xff]
        %v332 = vld [vmem:[%s158 + $0x4a0] sm:$0xff]
        %v333 = vld [vmem:[%s158 + $0x4a8] sm:$0xff]
        %v334 = vld [vmem:[%s158 + $0x4b0] sm:$0xff]
        %v335 = vld [vmem:[%s158 + $0x4b8] sm:$0xff]
        %v336 = vld [vmem:[%s158 + $0x4c0] sm:$0xff]
        %v337 = vld [vmem:[%s158 + $0x4c8] sm:$0xff]
        %v338 = vld [vmem:[%s158 + $0x4d0] sm:$0xff]
        %v339 = vld [vmem:[%s158 + $0x4d8] sm:$0xff]
        %v340 = vld [vmem:[%s158 + $0x4e0] sm:$0xff]
        %v341 = vld [vmem:[%s158 + $0x4e8] sm:$0xff]
        %v342 = vld [vmem:[%s158 + $0x4f0] sm:$0xff]
        %v343 = vld [vmem:[%s158 + $0x4f8] sm:$0xff]
        %v344 = vld [vmem:[%s158 + $0x500] sm:$0xff]
        %v345 = vld [vmem:[%s158 + $0x508] sm:$0xff]
        %v346 = vld [vmem:[%s158 + $0x510] sm:$0xff]
        %v347 = vld [vmem:[%s158 + $0x518] sm:$0xff]
        %v348 = vld [vmem:[%s158 + $0x520] sm:$0xff]
        %v349 = vld [vmem:[%s158 + $0x528] sm:$0xff]
        %v350 = vld [vmem:[%s158 + $0x530] sm:$0xff]
        %v351 = vld [vmem:[%s158 + $0x538] sm:$0xff]
        %v352 = vld [vmem:[%s158 + $0x540] sm:$0xff]
        %v353 = vld [vmem:[%s158 + $0x548] sm:$0xff]
        %v354 = vld [vmem:[%s158 + $0x550] sm:$0xff]
        %v355 = vld [vmem:[%s158 + $0x558] sm:$0xff]
        %v356 = vld [vmem:[%s158 + $0x560] sm:$0xff]
        %v357 = vld [vmem:[%s158 + $0x568] sm:$0xff]
        %v358 = vld [vmem:[%s158 + $0x570] sm:$0xff]
        %v359 = vld [vmem:[%s158 + $0x578] sm:$0xff]
        %v360 = vld [vmem:[%s158 + $0x580] sm:$0xff]
        %v361 = vld [vmem:[%s158 + $0x588] sm:$0xff]
        %v362 = vld [vmem:[%s158 + $0x590] sm:$0xff]
        %v363 = vld [vmem:[%s158 + $0x598] sm:$0xff]
        %v364 = vld [vmem:[%s158 + $0x5a0] sm:$0xff]
        %v365 = vld [vmem:[%s158 + $0x5a8] sm:$0xff]
        %v366 = vld [vmem:[%s158 + $0x5b0] sm:$0xff]
        %v367 = vld [vmem:[%s158 + $0x5b8] sm:$0xff]
        %v368 = vld [vmem:[%s158 + $0x5c0] sm:$0xff]
        %v369 = vld [vmem:[%s158 + $0x5c8] sm:$0xff]
        %v370 = vld [vmem:[%s158 + $0x5d0] sm:$0xff]
        %v371 = vld [vmem:[%s158 + $0x5d8] sm:$0xff]
        %v372 = vld [vmem:[%s158 + $0x5e0] sm:$0xff]
        %v373 = vld [vmem:[%s158 + $0x5e8] sm:$0xff]
        %v374 = vld [vmem:[%s158 + $0x5f0] sm:$0xff]
        %v375 = vld [vmem:[%s158 + $0x5f8] sm:$0xff]
        %v376 = vld [vmem:[%s158 + $0x600] sm:$0xff]
        %v377 = vld [vmem:[%s158 + $0x608] sm:$0xff]
        %v378 = vld [vmem:[%s158 + $0x610] sm:$0xff]
        %v379 = vld [vmem:[%s158 + $0x618] sm:$0xff]
        %v380 = vld [vmem:[%s158 + $0x620] sm:$0xff]
        %v381 = vld [vmem:[%s158 + $0x628] sm:$0xff]
        %v382 = vld [vmem:[%s158 + $0x630] sm:$0xff]
        %v383 = vld [vmem:[%s158 + $0x638] sm:$0xff]
        %v384 = vld [vmem:[%s158 + $0x640] sm:$0xff]
        %v385 = vld [vmem:[%s158 + $0x648] sm:$0xff]
        %v386 = vld [vmem:[%s158 + $0x650] sm:$0xff]
        %v387 = vld [vmem:[%s158 + $0x658] sm:$0xff]
        %v388 = vld [vmem:[%s158 + $0x660] sm:$0xff]
        %v389 = vld [vmem:[%s158 + $0x668] sm:$0xff]
        %v390 = vld [vmem:[%s158 + $0x670] sm:$0xff]
        %v391 = vld [vmem:[%s158 + $0x678] sm:$0xff]
        %v392 = vld [vmem:[%s158 + $0x680] sm:$0xff]
        %v393 = vld [vmem:[%s158 + $0x688] sm:$0xff]
        %v394 = vld [vmem:[%s158 + $0x690] sm:$0xff]
        %v395 = vld [vmem:[%s158 + $0x698] sm:$0xff]
        %v396 = vld [vmem:[%s158 + $0x6a0] sm:$0xff]
        %v397 = vld [vmem:[%s158 + $0x6a8] sm:$0xff]
        %v398 = vld [vmem:[%s158 + $0x6b0] sm:$0xff]
        %v399 = vld [vmem:[%s158 + $0x6b8] sm:$0xff]
        %v400 = vld [vmem:[%s158 + $0x6c0] sm:$0xff]
        %v401 = vld [vmem:[%s158 + $0x6c8] sm:$0xff]
        %v402 = vld [vmem:[%s158 + $0x6d0] sm:$0xff]
        %v403 = vld [vmem:[%s158 + $0x6d8] sm:$0xff]
        %v404 = vld [vmem:[%s158 + $0x6e0] sm:$0xff]
        %v405 = vld [vmem:[%s158 + $0x6e8] sm:$0xff]
        %v406 = vld [vmem:[%s158 + $0x6f0] sm:$0xff]
        %v407 = vld [vmem:[%s158 + $0x6f8] sm:$0xff]
        %v408 = vld [vmem:[%s158 + $0x700] sm:$0xff]
        %v409 = vld [vmem:[%s158 + $0x708] sm:$0xff]
        %v410 = vld [vmem:[%s158 + $0x710] sm:$0xff]
        %v411 = vld [vmem:[%s158 + $0x718] sm:$0xff]
        %v412 = vld [vmem:[%s158 + $0x720] sm:$0xff]
        %v413 = vld [vmem:[%s158 + $0x728] sm:$0xff]
        %v414 = vld [vmem:[%s158 + $0x730] sm:$0xff]
        %v415 = vld [vmem:[%s158 + $0x738] sm:$0xff]
        %v416 = vld [vmem:[%s158 + $0x740] sm:$0xff]
        %v417 = vld [vmem:[%s158 + $0x748] sm:$0xff]
        %v418 = vld [vmem:[%s158 + $0x750] sm:$0xff]
        %v419 = vld [vmem:[%s158 + $0x758] sm:$0xff]
        %v420 = vld [vmem:[%s158 + $0x760] sm:$0xff]
        %v421 = vld [vmem:[%s158 + $0x768] sm:$0xff]
        %v422 = vld [vmem:[%s158 + $0x770] sm:$0xff]
        %v423 = vld [vmem:[%s158 + $0x778] sm:$0xff]
        %v424 = vld [vmem:[%s158 + $0x780] sm:$0xff]
        %v425 = vld [vmem:[%s158 + $0x788] sm:$0xff]
        %v426 = vld [vmem:[%s158 + $0x790] sm:$0xff]
        %v427 = vld [vmem:[%s158 + $0x798] sm:$0xff]
        %v428 = vld [vmem:[%s158 + $0x7a0] sm:$0xff]
        %v429 = vld [vmem:[%s158 + $0x7a8] sm:$0xff]
        %v430 = vld [vmem:[%s158 + $0x7b0] sm:$0xff]
        %v431 = vld [vmem:[%s158 + $0x7b8] sm:$0xff]
        %v432 = vld [vmem:[%s158 + $0x7c0] sm:$0xff]
        %v433 = vld [vmem:[%s158 + $0x7c8] sm:$0xff]
        %v435 = vperm.slane %v183, 0
        %v436 = vperm.slane %v183, 1
        %v439 = vmul.f32 %v184, %v435
        %v440 = vmul.f32 %v185, %v436
        %v441 = vmul.f32 %v186, %v435
        %v442 = vmul.f32 %v187, %v436
        %v443 = vmul.f32 %v188, %v435
        %v444 = vmul.f32 %v189, %v436
        %v445 = vmul.f32 %v190, %v435
        %v446 = vmul.f32 %v191, %v436
        %v447 = vmul.f32 %v192, %v435
        %v448 = vmul.f32 %v193, %v436
        %v449 = vmul.f32 %v194, %v435
        %v450 = vmul.f32 %v195, %v436
        %v451 = vmul.f32 %v196, %v435
        %v452 = vmul.f32 %v197, %v436
        %v453 = vmul.f32 %v198, %v435
        %v454 = vmul.f32 %v199, %v436
        %v455 = vmul.f32 %v200, %v435
        %v456 = vmul.f32 %v201, %v436
        %v457 = vmul.f32 %v202, %v435
        %v458 = vmul.f32 %v203, %v436
        %v459 = vmul.f32 %v204, %v435
        %v460 = vmul.f32 %v205, %v436
        %v461 = vmul.f32 %v206, %v435
        %v462 = vmul.f32 %v207, %v436
        %v463 = vmul.f32 %v208, %v435
        %v464 = vmul.f32 %v209, %v436
        %v465 = vmul.f32 %v210, %v435
        %v466 = vmul.f32 %v211, %v436
        %v467 = vmul.f32 %v212, %v435
        %v468 = vmul.f32 %v213, %v436
        %v469 = vmul.f32 %v214, %v435
        %v470 = vmul.f32 %v215, %v436
        %v471 = vmul.f32 %v216, %v435
        %v472 = vmul.f32 %v217, %v436
        %v473 = vmul.f32 %v218, %v435
        %v474 = vmul.f32 %v219, %v436
        %v475 = vmul.f32 %v220, %v435
        %v476 = vmul.f32 %v221, %v436
        %v477 = vmul.f32 %v222, %v435
        %v478 = vmul.f32 %v223, %v436
        %v479 = vmul.f32 %v224, %v435
        %v480 = vmul.f32 %v225, %v436
        %v481 = vmul.f32 %v226, %v435
        %v482 = vmul.f32 %v227, %v436
        %v483 = vmul.f32 %v228, %v435
        %v484 = vmul.f32 %v229, %v436
        %v485 = vmul.f32 %v230, %v435
        %v486 = vmul.f32 %v231, %v436
        %v487 = vmul.f32 %v232, %v435
        %v488 = vmul.f32 %v233, %v436
        %v489 = vmul.f32 %v234, %v435
        %v490 = vmul.f32 %v235, %v436
        %v491 = vmul.f32 %v236, %v435
        %v492 = vmul.f32 %v237, %v436
        %v493 = vmul.f32 %v238, %v435
        %v494 = vmul.f32 %v239, %v436
        %v495 = vmul.f32 %v240, %v435
        %v496 = vmul.f32 %v241, %v436
        %v497 = vmul.f32 %v242, %v435
        %v498 = vmul.f32 %v243, %v436
        %v499 = vmul.f32 %v244, %v435
        %v500 = vmul.f32 %v245, %v436
        %v501 = vmul.f32 %v246, %v435
        %v502 = vmul.f32 %v247, %v436
        %v503 = vmul.f32 %v248, %v435
        %v504 = vmul.f32 %v249, %v436
        %v505 = vmul.f32 %v250, %v435
        %v506 = vmul.f32 %v251, %v436
        %v507 = vmul.f32 %v252, %v435
        %v508 = vmul.f32 %v253, %v436
        %v509 = vmul.f32 %v254, %v435
        %v510 = vmul.f32 %v255, %v436
        %v511 = vmul.f32 %v256, %v435
        %v512 = vmul.f32 %v257, %v436
        %v513 = vmul.f32 %v258, %v435
        %v514 = vmul.f32 %v259, %v436
        %v515 = vmul.f32 %v260, %v435
        %v516 = vmul.f32 %v261, %v436
        %v517 = vmul.f32 %v262, %v435
        %v518 = vmul.f32 %v263, %v436
        %v519 = vmul.f32 %v264, %v435
        %v520 = vmul.f32 %v265, %v436
        %v521 = vmul.f32 %v266, %v435
        %v522 = vmul.f32 %v267, %v436
        %v523 = vmul.f32 %v268, %v435
        %v524 = vmul.f32 %v269, %v436
        %v525 = vmul.f32 %v270, %v435
        %v526 = vmul.f32 %v271, %v436
        %v527 = vmul.f32 %v272, %v435
        %v528 = vmul.f32 %v273, %v436
        %v529 = vmul.f32 %v274, %v435
        %v530 = vmul.f32 %v275, %v436
        %v531 = vmul.f32 %v276, %v435
        %v532 = vmul.f32 %v277, %v436
        %v533 = vmul.f32 %v278, %v435
        %v534 = vmul.f32 %v279, %v436
        %v535 = vmul.f32 %v280, %v435
        %v536 = vmul.f32 %v281, %v436
        %v537 = vmul.f32 %v282, %v435
        %v538 = vmul.f32 %v283, %v436
        %v539 = vmul.f32 %v284, %v435
        %v540 = vmul.f32 %v285, %v436
        %v541 = vmul.f32 %v286, %v435
        %v542 = vmul.f32 %v287, %v436
        %v543 = vmul.f32 %v288, %v435
        %v544 = vmul.f32 %v289, %v436
        %v545 = vmul.f32 %v290, %v435
        %v546 = vmul.f32 %v291, %v436
        %v547 = vmul.f32 %v292, %v435
        %v548 = vmul.f32 %v293, %v436
        %v549 = vmul.f32 %v294, %v435
        %v550 = vmul.f32 %v295, %v436
        %v551 = vmul.f32 %v296, %v435
        %v552 = vmul.f32 %v297, %v436
        %v553 = vmul.f32 %v298, %v435
        %v554 = vmul.f32 %v299, %v436
        %v555 = vmul.f32 %v300, %v435
        %v556 = vmul.f32 %v301, %v436
        %v557 = vmul.f32 %v302, %v435
        %v558 = vmul.f32 %v303, %v436
        %v559 = vmul.f32 %v304, %v435
        %v560 = vmul.f32 %v305, %v436
        %v561 = vmul.f32 %v306, %v435
        %v562 = vmul.f32 %v307, %v436
        %v563 = vmul.f32 %v308, %v435
        %v564 = vmul.f32 %v309, %v436
        %v565 = vmul.f32 %v310, %v435
        %v566 = vmul.f32 %v311, %v436
        %v567 = vmul.f32 %v312, %v435
        %v568 = vmul.f32 %v313, %v436
        %v569 = vmul.f32 %v314, %v435
        %v570 = vmul.f32 %v315, %v436
        %v571 = vmul.f32 %v316, %v435
        %v572 = vmul.f32 %v317, %v436
        %v573 = vmul.f32 %v318, %v435
        %v574 = vmul.f32 %v319, %v436
        %v575 = vmul.f32 %v320, %v435
        %v576 = vmul.f32 %v321, %v436
        %v577 = vmul.f32 %v322, %v435
        %v578 = vmul.f32 %v323, %v436
        %v579 = vmul.f32 %v324, %v435
        %v580 = vmul.f32 %v325, %v436
        %v581 = vmul.f32 %v326, %v435
        %v582 = vmul.f32 %v327, %v436
        %v583 = vmul.f32 %v328, %v435
        %v584 = vmul.f32 %v329, %v436
        %v585 = vmul.f32 %v330, %v435
        %v586 = vmul.f32 %v331, %v436
        %v587 = vmul.f32 %v332, %v435
        %v588 = vmul.f32 %v333, %v436
        %v589 = vmul.f32 %v334, %v435
        %v590 = vmul.f32 %v335, %v436
        %v591 = vmul.f32 %v336, %v435
        %v592 = vmul.f32 %v337, %v436
        %v593 = vmul.f32 %v338, %v435
        %v594 = vmul.f32 %v339, %v436
        %v595 = vmul.f32 %v340, %v435
        %v596 = vmul.f32 %v341, %v436
        %v597 = vmul.f32 %v342, %v435
        %v598 = vmul.f32 %v343, %v436
        %v599 = vmul.f32 %v344, %v435
        %v600 = vmul.f32 %v345, %v436
        %v601 = vmul.f32 %v346, %v435
        %v602 = vmul.f32 %v347, %v436
        %v603 = vmul.f32 %v348, %v435
        %v604 = vmul.f32 %v349, %v436
        %v605 = vmul.f32 %v350, %v435
        %v606 = vmul.f32 %v351, %v436
        %v607 = vmul.f32 %v352, %v435
        %v608 = vmul.f32 %v353, %v436
        %v609 = vmul.f32 %v354, %v435
        %v610 = vmul.f32 %v355, %v436
        %v611 = vmul.f32 %v356, %v435
        %v612 = vmul.f32 %v357, %v436
        %v613 = vmul.f32 %v358, %v435
        %v614 = vmul.f32 %v359, %v436
        %v615 = vmul.f32 %v360, %v435
        %v616 = vmul.f32 %v361, %v436
        %v617 = vmul.f32 %v362, %v435
        %v618 = vmul.f32 %v363, %v436
        %v619 = vmul.f32 %v364, %v435
        %v620 = vmul.f32 %v365, %v436
        %v621 = vmul.f32 %v366, %v435
        %v622 = vmul.f32 %v367, %v436
        %v623 = vmul.f32 %v368, %v435
        %v624 = vmul.f32 %v369, %v436
        %v625 = vmul.f32 %v370, %v435
        %v626 = vmul.f32 %v371, %v436
        %v627 = vmul.f32 %v372, %v435
        %v628 = vmul.f32 %v373, %v436
        %v629 = vmul.f32 %v374, %v435
        %v630 = vmul.f32 %v375, %v436
        %v631 = vmul.f32 %v376, %v435
        %v632 = vmul.f32 %v377, %v436
        %v633 = vmul.f32 %v378, %v435
        %v634 = vmul.f32 %v379, %v436
        %v635 = vmul.f32 %v380, %v435
        %v636 = vmul.f32 %v381, %v436
        %v637 = vmul.f32 %v382, %v435
        %v638 = vmul.f32 %v383, %v436
        %v639 = vmul.f32 %v384, %v435
        %v640 = vmul.f32 %v385, %v436
        %v641 = vmul.f32 %v386, %v435
        %v642 = vmul.f32 %v387, %v436
        %v643 = vmul.f32 %v388, %v435
        %v644 = vmul.f32 %v389, %v436
        %v645 = vmul.f32 %v390, %v435
        %v646 = vmul.f32 %v391, %v436
        %v647 = vmul.f32 %v392, %v435
        %v648 = vmul.f32 %v393, %v436
        %v649 = vmul.f32 %v394, %v435
        %v650 = vmul.f32 %v395, %v436
        %v651 = vmul.f32 %v396, %v435
        %v652 = vmul.f32 %v397, %v436
        %v653 = vmul.f32 %v398, %v435
        %v654 = vmul.f32 %v399, %v436
        %v655 = vmul.f32 %v400, %v435
        %v656 = vmul.f32 %v401, %v436
        %v657 = vmul.f32 %v402, %v435
        %v658 = vmul.f32 %v403, %v436
        %v659 = vmul.f32 %v404, %v435
        %v660 = vmul.f32 %v405, %v436
        %v661 = vmul.f32 %v406, %v435
        %v662 = vmul.f32 %v407, %v436
        %v663 = vmul.f32 %v408, %v435
        %v664 = vmul.f32 %v409, %v436
        %v665 = vmul.f32 %v410, %v435
        %v666 = vmul.f32 %v411, %v436
        %v667 = vmul.f32 %v412, %v435
        %v668 = vmul.f32 %v413, %v436
        %v669 = vmul.f32 %v414, %v435
        %v670 = vmul.f32 %v415, %v436
        %v671 = vmul.f32 %v416, %v435
        %v672 = vmul.f32 %v417, %v436
        %v673 = vmul.f32 %v418, %v435
        %v674 = vmul.f32 %v419, %v436
        %v675 = vmul.f32 %v420, %v435
        %v676 = vmul.f32 %v421, %v436
        %v677 = vmul.f32 %v422, %v435
        %v678 = vmul.f32 %v423, %v436
        %v679 = vmul.f32 %v424, %v435
        %v680 = vmul.f32 %v425, %v436
        %v681 = vmul.f32 %v426, %v435
        %v682 = vmul.f32 %v427, %v436
        %v683 = vmul.f32 %v428, %v435
        %v684 = vmul.f32 %v429, %v436
        %v685 = vmul.f32 %v430, %v435
        %v686 = vmul.f32 %v431, %v436
        %v687 = vmul.f32 %v432, %v435
        %v688 = vmul.f32 %v433, %v436
        %689 = vst [vmem:[%s179] sm:$0xff] %v439
        %690 = vst [vmem:[%s179 + $0x8] sm:$0xff] %v440
        %691 = vst [vmem:[%s179 + $0x10] sm:$0xff] %v441
        %692 = vst [vmem:[%s179 + $0x18] sm:$0xff] %v442
        %693 = vst [vmem:[%s179 + $0x20] sm:$0xff] %v443
        %694 = vst [vmem:[%s179 + $0x28] sm:$0xff] %v444
        %695 = vst [vmem:[%s179 + $0x30] sm:$0xff] %v445
        %696 = vst [vmem:[%s179 + $0x38] sm:$0xff] %v446
        %697 = vst [vmem:[%s179 + $0x40] sm:$0xff] %v447
        %698 = vst [vmem:[%s179 + $0x48] sm:$0xff] %v448
        %699 = vst [vmem:[%s179 + $0x50] sm:$0xff] %v449
        %700 = vst [vmem:[%s179 + $0x58] sm:$0xff] %v450
        %701 = vst [vmem:[%s179 + $0x60] sm:$0xff] %v451
        %702 = vst [vmem:[%s179 + $0x68] sm:$0xff] %v452
        %703 = vst [vmem:[%s179 + $0x70] sm:$0xff] %v453
        %704 = vst [vmem:[%s179 + $0x78] sm:$0xff] %v454
        %705 = vst [vmem:[%s179 + $0x80] sm:$0xff] %v455
        %706 = vst [vmem:[%s179 + $0x88] sm:$0xff] %v456
        %707 = vst [vmem:[%s179 + $0x90] sm:$0xff] %v457
        %708 = vst [vmem:[%s179 + $0x98] sm:$0xff] %v458
        %709 = vst [vmem:[%s179 + $0xa0] sm:$0xff] %v459
        %710 = vst [vmem:[%s179 + $0xa8] sm:$0xff] %v460
        %711 = vst [vmem:[%s179 + $0xb0] sm:$0xff] %v461
        %712 = vst [vmem:[%s179 + $0xb8] sm:$0xff] %v462
        %713 = vst [vmem:[%s179 + $0xc0] sm:$0xff] %v463
        %714 = vst [vmem:[%s179 + $0xc8] sm:$0xff] %v464
        %715 = vst [vmem:[%s179 + $0xd0] sm:$0xff] %v465
        %716 = vst [vmem:[%s179 + $0xd8] sm:$0xff] %v466
        %717 = vst [vmem:[%s179 + $0xe0] sm:$0xff] %v467
        %718 = vst [vmem:[%s179 + $0xe8] sm:$0xff] %v468
        %719 = vst [vmem:[%s179 + $0xf0] sm:$0xff] %v469
        %720 = vst [vmem:[%s179 + $0xf8] sm:$0xff] %v470
        %721 = vst [vmem:[%s179 + $0x100] sm:$0xff] %v471
        %722 = vst [vmem:[%s179 + $0x108] sm:$0xff] %v472
        %723 = vst [vmem:[%s179 + $0x110] sm:$0xff] %v473
        %724 = vst [vmem:[%s179 + $0x118] sm:$0xff] %v474
        %725 = vst [vmem:[%s179 + $0x120] sm:$0xff] %v475
        %726 = vst [vmem:[%s179 + $0x128] sm:$0xff] %v476
        %727 = vst [vmem:[%s179 + $0x130] sm:$0xff] %v477
        %728 = vst [vmem:[%s179 + $0x138] sm:$0xff] %v478
        %729 = vst [vmem:[%s179 + $0x140] sm:$0xff] %v479
        %730 = vst [vmem:[%s179 + $0x148] sm:$0xff] %v480
        %731 = vst [vmem:[%s179 + $0x150] sm:$0xff] %v481
        %732 = vst [vmem:[%s179 + $0x158] sm:$0xff] %v482
        %733 = vst [vmem:[%s179 + $0x160] sm:$0xff] %v483
        %734 = vst [vmem:[%s179 + $0x168] sm:$0xff] %v484
        %735 = vst [vmem:[%s179 + $0x170] sm:$0xff] %v485
        %736 = vst [vmem:[%s179 + $0x178] sm:$0xff] %v486
        %737 = vst [vmem:[%s179 + $0x180] sm:$0xff] %v487
        %738 = vst [vmem:[%s179 + $0x188] sm:$0xff] %v488
        %739 = vst [vmem:[%s179 + $0x190] sm:$0xff] %v489
        %740 = vst [vmem:[%s179 + $0x198] sm:$0xff] %v490
        %741 = vst [vmem:[%s179 + $0x1a0] sm:$0xff] %v491
        %742 = vst [vmem:[%s179 + $0x1a8] sm:$0xff] %v492
        %743 = vst [vmem:[%s179 + $0x1b0] sm:$0xff] %v493
        %744 = vst [vmem:[%s179 + $0x1b8] sm:$0xff] %v494
        %745 = vst [vmem:[%s179 + $0x1c0] sm:$0xff] %v495
        %746 = vst [vmem:[%s179 + $0x1c8] sm:$0xff] %v496
        %747 = vst [vmem:[%s179 + $0x1d0] sm:$0xff] %v497
        %748 = vst [vmem:[%s179 + $0x1d8] sm:$0xff] %v498
        %749 = vst [vmem:[%s179 + $0x1e0] sm:$0xff] %v499
        %750 = vst [vmem:[%s179 + $0x1e8] sm:$0xff] %v500
        %751 = vst [vmem:[%s179 + $0x1f0] sm:$0xff] %v501
        %752 = vst [vmem:[%s179 + $0x1f8] sm:$0xff] %v502
        %753 = vst [vmem:[%s179 + $0x200] sm:$0xff] %v503
        %754 = vst [vmem:[%s179 + $0x208] sm:$0xff] %v504
        %755 = vst [vmem:[%s179 + $0x210] sm:$0xff] %v505
        %756 = vst [vmem:[%s179 + $0x218] sm:$0xff] %v506
        %757 = vst [vmem:[%s179 + $0x220] sm:$0xff] %v507
        %758 = vst [vmem:[%s179 + $0x228] sm:$0xff] %v508
        %759 = vst [vmem:[%s179 + $0x230] sm:$0xff] %v509
        %760 = vst [vmem:[%s179 + $0x238] sm:$0xff] %v510
        %761 = vst [vmem:[%s179 + $0x240] sm:$0xff] %v511
        %762 = vst [vmem:[%s179 + $0x248] sm:$0xff] %v512
        %763 = vst [vmem:[%s179 + $0x250] sm:$0xff] %v513
        %764 = vst [vmem:[%s179 + $0x258] sm:$0xff] %v514
        %765 = vst [vmem:[%s179 + $0x260] sm:$0xff] %v515
        %766 = vst [vmem:[%s179 + $0x268] sm:$0xff] %v516
        %767 = vst [vmem:[%s179 + $0x270] sm:$0xff] %v517
        %768 = vst [vmem:[%s179 + $0x278] sm:$0xff] %v518
        %769 = vst [vmem:[%s179 + $0x280] sm:$0xff] %v519
        %770 = vst [vmem:[%s179 + $0x288] sm:$0xff] %v520
        %771 = vst [vmem:[%s179 + $0x290] sm:$0xff] %v521
        %772 = vst [vmem:[%s179 + $0x298] sm:$0xff] %v522
        %773 = vst [vmem:[%s179 + $0x2a0] sm:$0xff] %v523
        %774 = vst [vmem:[%s179 + $0x2a8] sm:$0xff] %v524
        %775 = vst [vmem:[%s179 + $0x2b0] sm:$0xff] %v525
        %776 = vst [vmem:[%s179 + $0x2b8] sm:$0xff] %v526
        %777 = vst [vmem:[%s179 + $0x2c0] sm:$0xff] %v527
        %778 = vst [vmem:[%s179 + $0x2c8] sm:$0xff] %v528
        %779 = vst [vmem:[%s179 + $0x2d0] sm:$0xff] %v529
        %780 = vst [vmem:[%s179 + $0x2d8] sm:$0xff] %v530
        %781 = vst [vmem:[%s179 + $0x2e0] sm:$0xff] %v531
        %782 = vst [vmem:[%s179 + $0x2e8] sm:$0xff] %v532
        %783 = vst [vmem:[%s179 + $0x2f0] sm:$0xff] %v533
        %784 = vst [vmem:[%s179 + $0x2f8] sm:$0xff] %v534
        %785 = vst [vmem:[%s179 + $0x300] sm:$0xff] %v535
        %786 = vst [vmem:[%s179 + $0x308] sm:$0xff] %v536
        %787 = vst [vmem:[%s179 + $0x310] sm:$0xff] %v537
        %788 = vst [vmem:[%s179 + $0x318] sm:$0xff] %v538
        %789 = vst [vmem:[%s179 + $0x320] sm:$0xff] %v539
        %790 = vst [vmem:[%s179 + $0x328] sm:$0xff] %v540
        %791 = vst [vmem:[%s179 + $0x330] sm:$0xff] %v541
        %792 = vst [vmem:[%s179 + $0x338] sm:$0xff] %v542
        %793 = vst [vmem:[%s179 + $0x340] sm:$0xff] %v543
        %794 = vst [vmem:[%s179 + $0x348] sm:$0xff] %v544
        %795 = vst [vmem:[%s179 + $0x350] sm:$0xff] %v545
        %796 = vst [vmem:[%s179 + $0x358] sm:$0xff] %v546
        %797 = vst [vmem:[%s179 + $0x360] sm:$0xff] %v547
        %798 = vst [vmem:[%s179 + $0x368] sm:$0xff] %v548
        %799 = vst [vmem:[%s179 + $0x370] sm:$0xff] %v549
        %800 = vst [vmem:[%s179 + $0x378] sm:$0xff] %v550
        %801 = vst [vmem:[%s179 + $0x380] sm:$0xff] %v551
        %802 = vst [vmem:[%s179 + $0x388] sm:$0xff] %v552
        %803 = vst [vmem:[%s179 + $0x390] sm:$0xff] %v553
        %804 = vst [vmem:[%s179 + $0x398] sm:$0xff] %v554
        %805 = vst [vmem:[%s179 + $0x3a0] sm:$0xff] %v555
        %806 = vst [vmem:[%s179 + $0x3a8] sm:$0xff] %v556
        %807 = vst [vmem:[%s179 + $0x3b0] sm:$0xff] %v557
        %808 = vst [vmem:[%s179 + $0x3b8] sm:$0xff] %v558
        %809 = vst [vmem:[%s179 + $0x3c0] sm:$0xff] %v559
        %810 = vst [vmem:[%s179 + $0x3c8] sm:$0xff] %v560
        %811 = vst [vmem:[%s179 + $0x3d0] sm:$0xff] %v561
        %812 = vst [vmem:[%s179 + $0x3d8] sm:$0xff] %v562
        %813 = vst [vmem:[%s179 + $0x3e0] sm:$0xff] %v563
        %814 = vst [vmem:[%s179 + $0x3e8] sm:$0xff] %v564
        %815 = vst [vmem:[%s179 + $0x3f0] sm:$0xff] %v565
        %816 = vst [vmem:[%s179 + $0x3f8] sm:$0xff] %v566
        %817 = vst [vmem:[%s179 + $0x400] sm:$0xff] %v567
        %818 = vst [vmem:[%s179 + $0x408] sm:$0xff] %v568
        %819 = vst [vmem:[%s179 + $0x410] sm:$0xff] %v569
        %820 = vst [vmem:[%s179 + $0x418] sm:$0xff] %v570
        %821 = vst [vmem:[%s179 + $0x420] sm:$0xff] %v571
        %822 = vst [vmem:[%s179 + $0x428] sm:$0xff] %v572
        %823 = vst [vmem:[%s179 + $0x430] sm:$0xff] %v573
        %824 = vst [vmem:[%s179 + $0x438] sm:$0xff] %v574
        %825 = vst [vmem:[%s179 + $0x440] sm:$0xff] %v575
        %826 = vst [vmem:[%s179 + $0x448] sm:$0xff] %v576
        %827 = vst [vmem:[%s179 + $0x450] sm:$0xff] %v577
        %828 = vst [vmem:[%s179 + $0x458] sm:$0xff] %v578
        %829 = vst [vmem:[%s179 + $0x460] sm:$0xff] %v579
        %830 = vst [vmem:[%s179 + $0x468] sm:$0xff] %v580
        %831 = vst [vmem:[%s179 + $0x470] sm:$0xff] %v581
        %832 = vst [vmem:[%s179 + $0x478] sm:$0xff] %v582
        %833 = vst [vmem:[%s179 + $0x480] sm:$0xff] %v583
        %834 = vst [vmem:[%s179 + $0x488] sm:$0xff] %v584
        %835 = vst [vmem:[%s179 + $0x490] sm:$0xff] %v585
        %836 = vst [vmem:[%s179 + $0x498] sm:$0xff] %v586
        %837 = vst [vmem:[%s179 + $0x4a0] sm:$0xff] %v587
        %838 = vst [vmem:[%s179 + $0x4a8] sm:$0xff] %v588
        %839 = vst [vmem:[%s179 + $0x4b0] sm:$0xff] %v589
        %840 = vst [vmem:[%s179 + $0x4b8] sm:$0xff] %v590
        %841 = vst [vmem:[%s179 + $0x4c0] sm:$0xff] %v591
        %842 = vst [vmem:[%s179 + $0x4c8] sm:$0xff] %v592
        %843 = vst [vmem:[%s179 + $0x4d0] sm:$0xff] %v593
        %844 = vst [vmem:[%s179 + $0x4d8] sm:$0xff] %v594
        %845 = vst [vmem:[%s179 + $0x4e0] sm:$0xff] %v595
        %846 = vst [vmem:[%s179 + $0x4e8] sm:$0xff] %v596
        %847 = vst [vmem:[%s179 + $0x4f0] sm:$0xff] %v597
        %848 = vst [vmem:[%s179 + $0x4f8] sm:$0xff] %v598
        %849 = vst [vmem:[%s179 + $0x500] sm:$0xff] %v599
        %850 = vst [vmem:[%s179 + $0x508] sm:$0xff] %v600
        %851 = vst [vmem:[%s179 + $0x510] sm:$0xff] %v601
        %852 = vst [vmem:[%s179 + $0x518] sm:$0xff] %v602
        %853 = vst [vmem:[%s179 + $0x520] sm:$0xff] %v603
        %854 = vst [vmem:[%s179 + $0x528] sm:$0xff] %v604
        %855 = vst [vmem:[%s179 + $0x530] sm:$0xff] %v605
        %856 = vst [vmem:[%s179 + $0x538] sm:$0xff] %v606
        %857 = vst [vmem:[%s179 + $0x540] sm:$0xff] %v607
        %858 = vst [vmem:[%s179 + $0x548] sm:$0xff] %v608
        %859 = vst [vmem:[%s179 + $0x550] sm:$0xff] %v609
        %860 = vst [vmem:[%s179 + $0x558] sm:$0xff] %v610
        %861 = vst [vmem:[%s179 + $0x560] sm:$0xff] %v611
        %862 = vst [vmem:[%s179 + $0x568] sm:$0xff] %v612
        %863 = vst [vmem:[%s179 + $0x570] sm:$0xff] %v613
        %864 = vst [vmem:[%s179 + $0x578] sm:$0xff] %v614
        %865 = vst [vmem:[%s179 + $0x580] sm:$0xff] %v615
        %866 = vst [vmem:[%s179 + $0x588] sm:$0xff] %v616
        %867 = vst [vmem:[%s179 + $0x590] sm:$0xff] %v617
        %868 = vst [vmem:[%s179 + $0x598] sm:$0xff] %v618
        %869 = vst [vmem:[%s179 + $0x5a0] sm:$0xff] %v619
        %870 = vst [vmem:[%s179 + $0x5a8] sm:$0xff] %v620
        %871 = vst [vmem:[%s179 + $0x5b0] sm:$0xff] %v621
        %872 = vst [vmem:[%s179 + $0x5b8] sm:$0xff] %v622
        %873 = vst [vmem:[%s179 + $0x5c0] sm:$0xff] %v623
        %874 = vst [vmem:[%s179 + $0x5c8] sm:$0xff] %v624
        %875 = vst [vmem:[%s179 + $0x5d0] sm:$0xff] %v625
        %876 = vst [vmem:[%s179 + $0x5d8] sm:$0xff] %v626
        %877 = vst [vmem:[%s179 + $0x5e0] sm:$0xff] %v627
        %878 = vst [vmem:[%s179 + $0x5e8] sm:$0xff] %v628
        %879 = vst [vmem:[%s179 + $0x5f0] sm:$0xff] %v629
        %880 = vst [vmem:[%s179 + $0x5f8] sm:$0xff] %v630
        %881 = vst [vmem:[%s179 + $0x600] sm:$0xff] %v631
        %882 = vst [vmem:[%s179 + $0x608] sm:$0xff] %v632
        %883 = vst [vmem:[%s179 + $0x610] sm:$0xff] %v633
        %884 = vst [vmem:[%s179 + $0x618] sm:$0xff] %v634
        %885 = vst [vmem:[%s179 + $0x620] sm:$0xff] %v635
        %886 = vst [vmem:[%s179 + $0x628] sm:$0xff] %v636
        %887 = vst [vmem:[%s179 + $0x630] sm:$0xff] %v637
        %888 = vst [vmem:[%s179 + $0x638] sm:$0xff] %v638
        %889 = vst [vmem:[%s179 + $0x640] sm:$0xff] %v639
        %890 = vst [vmem:[%s179 + $0x648] sm:$0xff] %v640
        %891 = vst [vmem:[%s179 + $0x650] sm:$0xff] %v641
        %892 = vst [vmem:[%s179 + $0x658] sm:$0xff] %v642
        %893 = vst [vmem:[%s179 + $0x660] sm:$0xff] %v643
        %894 = vst [vmem:[%s179 + $0x668] sm:$0xff] %v644
        %895 = vst [vmem:[%s179 + $0x670] sm:$0xff] %v645
        %896 = vst [vmem:[%s179 + $0x678] sm:$0xff] %v646
        %897 = vst [vmem:[%s179 + $0x680] sm:$0xff] %v647
        %898 = vst [vmem:[%s179 + $0x688] sm:$0xff] %v648
        %899 = vst [vmem:[%s179 + $0x690] sm:$0xff] %v649
        %900 = vst [vmem:[%s179 + $0x698] sm:$0xff] %v650
        %901 = vst [vmem:[%s179 + $0x6a0] sm:$0xff] %v651
        %902 = vst [vmem:[%s179 + $0x6a8] sm:$0xff] %v652
        %903 = vst [vmem:[%s179 + $0x6b0] sm:$0xff] %v653
        %904 = vst [vmem:[%s179 + $0x6b8] sm:$0xff] %v654
        %905 = vst [vmem:[%s179 + $0x6c0] sm:$0xff] %v655
        %906 = vst [vmem:[%s179 + $0x6c8] sm:$0xff] %v656
        %907 = vst [vmem:[%s179 + $0x6d0] sm:$0xff] %v657
        %908 = vst [vmem:[%s179 + $0x6d8] sm:$0xff] %v658
        %909 = vst [vmem:[%s179 + $0x6e0] sm:$0xff] %v659
        %910 = vst [vmem:[%s179 + $0x6e8] sm:$0xff] %v660
        %911 = vst [vmem:[%s179 + $0x6f0] sm:$0xff] %v661
        %912 = vst [vmem:[%s179 + $0x6f8] sm:$0xff] %v662
        %913 = vst [vmem:[%s179 + $0x700] sm:$0xff] %v663
        %914 = vst [vmem:[%s179 + $0x708] sm:$0xff] %v664
        %915 = vst [vmem:[%s179 + $0x710] sm:$0xff] %v665
        %916 = vst [vmem:[%s179 + $0x718] sm:$0xff] %v666
        %917 = vst [vmem:[%s179 + $0x720] sm:$0xff] %v667
        %918 = vst [vmem:[%s179 + $0x728] sm:$0xff] %v668
        %919 = vst [vmem:[%s179 + $0x730] sm:$0xff] %v669
        %920 = vst [vmem:[%s179 + $0x738] sm:$0xff] %v670
        %921 = vst [vmem:[%s179 + $0x740] sm:$0xff] %v671
        %922 = vst [vmem:[%s179 + $0x748] sm:$0xff] %v672
        %923 = vst [vmem:[%s179 + $0x750] sm:$0xff] %v673
        %924 = vst [vmem:[%s179 + $0x758] sm:$0xff] %v674
        %925 = vst [vmem:[%s179 + $0x760] sm:$0xff] %v675
        %926 = vst [vmem:[%s179 + $0x768] sm:$0xff] %v676
        %927 = vst [vmem:[%s179 + $0x770] sm:$0xff] %v677
        %928 = vst [vmem:[%s179 + $0x778] sm:$0xff] %v678
        %929 = vst [vmem:[%s179 + $0x780] sm:$0xff] %v679
        %930 = vst [vmem:[%s179 + $0x788] sm:$0xff] %v680
        %931 = vst [vmem:[%s179 + $0x790] sm:$0xff] %v681
        %932 = vst [vmem:[%s179 + $0x798] sm:$0xff] %v682
        %933 = vst [vmem:[%s179 + $0x7a0] sm:$0xff] %v683
        %934 = vst [vmem:[%s179 + $0x7a8] sm:$0xff] %v684
        %935 = vst [vmem:[%s179 + $0x7b0] sm:$0xff] %v685
        %936 = vst [vmem:[%s179 + $0x7b8] sm:$0xff] %v686
        %937 = vst [vmem:[%s179 + $0x7c0] sm:$0xff] %v687
        %938 = vst [vmem:[%s179 + $0x7c8] sm:$0xff] %v688
        %s939 = sand.u32 %s75, 1
        %s940 = scalar_lea.sflag [#allocation4], %s939
        %s941 = sand.u32 %s75, 1
        %s942 = smul.addr %s941, 2000
        %s943 = scalar_lea.vmem [#allocation7], %s942
        // Predicated region
        $region37: #{tpu_custom_call.1} parent=27 // pred_check
          %p944 = pneg %p85
        $region38: #{tpu_custom_call.1} parent=27 // pred_check_branch
          %946 = sbr.rel (%p944) target = $region40
        $region39: #{tpu_custom_call.1} parent=27 // pred_region
          %s947 = smul.u32 125, %s20
          %949 = vsyncadd %s940, 0
          %s950 = smul.addr %s947, 2
          %s951 = smul.addr %s950, 8
          %s952 = scalar_lea.hbm %s2, %s951
          %s953 = sshll.u32 %s943, 4
          %s954 = int_to_ptr.vmem [resolvable:$true] %s953
          %s955 = sshll.u32 %s952, 4
          %s956 = int_to_ptr.hbm [resolvable:$true] %s955
          %961 = dma.vmem_to_hbm [thread:$0]  %s954, 32000, %s956, %s940, 256, 256, 16
        $region40: #{tpu_custom_call.1} parent=27 // pred_fallthru
          _
      $region28: #{tpu_custom_call.1} parent=5 // pred_fallthru
        _
      %p962 = scmp.le.s32.totalorder 2, %s15
      // Predicated region
      $region41: #{tpu_custom_call.1} parent=5 // pred_check
        %p963 = pneg %p962
      $region42: #{tpu_custom_call.1} parent=5 // pred_check_branch
        %965 = sbr.rel (%p963) target = $region44
      $region43: #{tpu_custom_call.1} parent=5 // pred_region
        %s966 = ssub.s32 %s15, 2
        // Predicated region
        $region45: #{tpu_custom_call.1} parent=43 // pred_check
          %p967 = pneg %p91
        $region46: #{tpu_custom_call.1} parent=43 // pred_check_branch
          %969 = sbr.rel (%p967) target = $region48
        $region47: #{tpu_custom_call.1} parent=43 // pred_region
          %s970 = sand.u32 %s76, 1
          %s971 = scalar_lea.sflag [#allocation4], %s970
          %s972 = sand.u32 %s76, 1
          %s973 = smul.addr %s972, 2000
          %s974 = scalar_lea.vmem [#allocation7], %s973
          %976 = dma.done %s971, 32000
        $region48: #{tpu_custom_call.1} parent=43 // pred_fallthru
          _
      $region44: #{tpu_custom_call.1} parent=5 // pred_fallthru
        _
    $region6: #{tpu_custom_call.1} parent=1 // loop_footer
      %s19 = sadd.s32 1, %s15
    $region7: #{tpu_custom_call.1} parent=1 // loop_footer_branch
      %14 = sbr.rel target = $region3
    $region8: #{tpu_custom_call.1} parent=1 // loop_exit
      _
    %977 = vsyncpa [#allocation3], 1
    %s978 = scalar_lea.sflag [#allocation3], 1
    %979 = vsyncpa %s978, 1
    %980 = vsyncpa [#allocation6], 1
    %s981 = scalar_lea.sflag [#allocation6], 1
    %982 = vsyncpa %s981, 1
    %983 = vsyncpa [#allocation4], 1
    %s984 = scalar_lea.sflag [#allocation4], 1
    %985 = vsyncpa %s984, 1

</llo_original>
